<compile_context>
chip_gen: v7x
topology: tpu7x:2x2x1
jax: 0.10.0
libtpu: 0.0.40
codegen_flags: <defaults>
</compile_context>

<pallas_src>
import functools

import jax
import jax.numpy as jnp
from jax.experimental import pallas as pl
from jax.experimental.pallas import tpu as pltpu

LANES = 128
SUBLANES = 8


def _round_up(x, m):
  return (x + m - 1) // m * m


def _default_target_tm():
  """Generation-aware row-tile target (rows of 128 lanes, f32-equivalent).

  v7x reports ~64 MiB VMEM/TC but has ~3.2 TB/s HBM -> use 8192 rows (4 MiB
  tile) to amortize the ~0.35 us/step overhead.  v5e/v6e report 128 MiB ->
  4096 rows (2 MiB tile, ~12 MiB total double-buffered, fits v5e's 16 MiB
  scoped-VMEM default) already reaches ~85% of their HBM roofline.
  """
  try:
    info = pltpu.get_tpu_info()
    vmem_bytes = int(getattr(info, "vmem_capacity_bytes", 128 << 20))
  except Exception:  # best-effort query; fall back to the safe default
    vmem_bytes = 128 << 20
  return 8192 if vmem_bytes <= (64 << 20) else 4096


def _sse_kernel(sr_ref, recon_ref, hid_ref, sse1_ref, sse2_ref):
  """grid = (row_tiles, depth); axis 0 "parallel", axis 1 "arbitrary".

  sr_ref, recon_ref : (TM, 128) native-dtype VMEM (resident across depth)
  hid_ref           : (TM, 128) native-dtype VMEM (depth-streamed, squeezed)
  sse1_ref          : (1, 8, 128) f32    partial SSE(recon, sr) for this tile
  sse2_ref          : (1, 1, 8, 128) f32 partial SSE(hidden[s], sr)
  """
  s = pl.program_id(1)
  sr = sr_ref[...].astype(jnp.float32)

  @pl.when(s == 0)
  def _():
    d = recon_ref[...].astype(jnp.float32) - sr
    sse1_ref[0] = jnp.sum((d * d).reshape(-1, SUBLANES, LANES), axis=0)

  dh = hid_ref[...].astype(jnp.float32) - sr
  sse2_ref[0, 0] = jnp.sum((dh * dh).reshape(-1, SUBLANES, LANES), axis=0)


@functools.partial(
    jax.jit,
    static_argnames=("alpha", "beta", "inference_depth", "target_tm"))
def drcn_loss(recon_sr_img, sr_img, hidden, weights, *,
              alpha, beta, inference_depth, target_tm=None):
  """recon_sr_img, sr_img: (B, C, H, W); hidden: (D, B, C, H, W)."""
  assert hidden.shape[0] == inference_depth
  assert recon_sr_img.shape == sr_img.shape == hidden.shape[1:]
  depth = inference_depth
  n_img = sr_img.size
  f32 = jnp.float32

  if target_tm is None:
    target_tm = _default_target_tm()
  tm_cap = max(SUBLANES, _round_up(int(target_tm), SUBLANES))

  rem = n_img % LANES           # elements past the last complete 128-lane row
  rows_full = n_img // LANES    # complete 128-lane rows
  # Keep >= 2 row tiles whenever the data allows (both v7x TCs stay busy).
  half = (rows_full // 2) // SUBLANES * SUBLANES
  tm = min(tm_cap, max(SUBLANES, half))
  # Kernel covers only the evenly-divisible prefix of complete row tiles; the
  # lane-dense reshape below is a free bitcast only when rem == 0.
  n_tiles = rows_full // tm if rem == 0 else 0
  n_main = n_tiles * tm * LANES

  sr_flat = sr_img.reshape(-1)
  recon_flat = recon_sr_img.reshape(-1)
  hid_flat = hidden.reshape(depth, -1)

  sse1 = jnp.zeros((), f32)
  sse2 = jnp.zeros((), f32)

  if n_tiles > 0:
    # Free reshapes (no pad / slice / copy of the depth-sized hidden stream).
    sr2 = sr_flat.reshape(rows_full, LANES)
    recon2 = recon_flat.reshape(rows_full, LANES)
    hid3 = hid_flat.reshape(depth, rows_full, LANES)

    itemsize = max(sr2.dtype.itemsize, recon2.dtype.itemsize,
                   hid3.dtype.itemsize)
    tile_bytes = tm * LANES * itemsize
    # 3 inputs x 2 buffers + slack for the tiny (8,128) output blocks.
    vmem_need = 6 * tile_bytes + (4 << 20)
    vmem_limit = int(min(max(vmem_need, 32 << 20), 56 << 20))

    out_bytes = n_tiles * (depth + 1) * SUBLANES * LANES * 4
    cost = pl.CostEstimate(
        flops=3 * (depth + 1) * n_main,
        transcendentals=0,
        bytes_accessed=(depth + 2) * n_main * itemsize + out_bytes)

    part1_shape = jax.ShapeDtypeStruct((n_tiles, SUBLANES, LANES), f32)
    part2_shape = jax.ShapeDtypeStruct((n_tiles, depth, SUBLANES, LANES), f32)

    sse1_part, sse2_part = pl.pallas_call(
        _sse_kernel,
        out_shape=(part1_shape, part2_shape),
        grid_spec=pltpu.PrefetchScalarGridSpec(
            num_scalar_prefetch=0,
            grid=(n_tiles, depth),
            in_specs=[
                pl.BlockSpec((tm, LANES), lambda m, s: (m, 0)),          # sr
                pl.BlockSpec((tm, LANES), lambda m, s: (m, 0)),          # recon
                pl.BlockSpec((pl.Squeezed(), tm, LANES),
                             lambda m, s: (s, m, 0)),                    # hidden
            ],
            out_specs=(
                pl.BlockSpec((1, SUBLANES, LANES), lambda m, s: (m, 0, 0)),
                pl.BlockSpec((1, 1, SUBLANES, LANES),
                             lambda m, s: (m, s, 0, 0)),
            ),
        ),
        compiler_params=pltpu.CompilerParams(
            dimension_semantics=("parallel", "arbitrary"),
            vmem_limit_bytes=vmem_limit),
        cost_estimate=cost,
    )(sr2, recon2, hid3)

    sse1 = jnp.sum(sse1_part)
    sse2 = jnp.sum(sse2_part)

  if n_main < n_img:
    # Small tail (leftover rows / 128-misaligned remainder): plain JAX.  The
    # slices feed straight into reductions so XLA fuses them (no extra copy).
    sr_t = sr_flat[n_main:].astype(f32)
    d1 = recon_flat[n_main:].astype(f32) - sr_t
    sse1 = sse1 + jnp.sum(d1 * d1)
    d2 = hid_flat[:, n_main:].astype(f32) - sr_t[None, :]
    sse2 = sse2 + jnp.sum(d2 * d2)

  loss_1 = sse1 / n_img
  loss_2 = sse2 / (n_img * depth)

  # model.get_l2_penalty() stand-in: sum of squared weights (read-once, so a
  # plain-JAX reduction costs the same HBM traffic as doing it in-kernel).
  # TODO(synk): the real model exposes get_l2_penalty() over all its params;
  # here a single synthetic weight tensor stands in for the parameter pytree.
  l2_penalty = jnp.sum(jnp.square(weights.astype(f32)))

  return loss_1 * (1.0 - alpha) + loss_2 * alpha + beta * l2_penalty


def _reference_loss(recon, sr, hidden, weights, alpha, beta, depth):
  mse = lambda a, b: jnp.mean((a.astype(jnp.float32) - b.astype(jnp.float32)) ** 2)
  l1 = mse(recon, sr)
  l2 = sum(mse(hidden[i], sr) for i in range(depth)) / depth
  pen = jnp.sum(weights.astype(jnp.float32) ** 2)
  return l1 * (1 - alpha) + l2 * alpha + beta * pen


if __name__ == "__main__":
  key = jax.random.PRNGKey(0)
  inference_depth = 4
  alpha, alpha_decay_epoch, beta = 0.5, 10, 1e-4
  _ = alpha / alpha_decay_epoch   # alpha_decay (training-time schedule only)

  # (B, C, H, W) test shapes:
  #  1) 2048 elems: rem == 0, 2 full row tiles, no tail  (pure kernel path)
  #  2) 1536 elems: rem == 0, 1 full row tile + row tail (kernel + JAX tail)
  #  3) 1350 elems: rem != 0                             (pure-JAX fallback)
  shapes = [(2, 4, 16, 16), (2, 3, 16, 16), (2, 3, 15, 15)]

  k_w, key = jax.random.split(key)
  weights = 0.05 * jax.random.normal(k_w, (32, 32, 3, 3), jnp.float32)

  for shp in shapes:
    k1, k2, k3, key = jax.random.split(key, 4)
    recon_sr_img = jax.random.normal(k1, shp, jnp.float32)
    sr_img = jax.random.normal(k2, shp, jnp.float32)
    hidden = jax.random.normal(k3, (inference_depth,) + shp, jnp.float32)

    loss = drcn_loss(recon_sr_img, sr_img, hidden, weights,
                     alpha=alpha, beta=beta, inference_depth=inference_depth)
    loss = jax.block_until_ready(loss)

    loss_ref = _reference_loss(recon_sr_img, sr_img, hidden, weights,
                               alpha, beta, inference_depth)
    assert jnp.allclose(loss, loss_ref, rtol=1e-5, atol=1e-5), (shp, loss,
                                                                loss_ref)

  print("KERNEL_OK")
</pallas_src>

<mosaic_0001>
module attributes {stable_mosaic.version = 11 : i64} {
  func.func @_sse_kernel(%arg0: i32, %arg1: i32, %arg2: memref<8x128xf32, #tpu.memory_space<vmem>>, %arg3: memref<8x128xf32, #tpu.memory_space<vmem>>, %arg4: memref<1x8x128xf32, #tpu.memory_space<vmem>>, %arg5: memref<1x8x128xf32, #tpu.memory_space<vmem>>, %arg6: memref<1x1x8x128xf32, #tpu.memory_space<vmem>>) attributes {dimension_semantics = [#tpu.dimension_semantics<parallel>, #tpu.dimension_semantics<arbitrary>], iteration_bounds = array<i64: 2, 4>, scalar_prefetch = 0 : i64, scratch_operands = 0 : i64, tpu.core_type = #tpu.core_type<tc>, window_params = [{transform_indices = @transform_0, window_bounds = array<i64: 8, 128>}, {transform_indices = @transform_1, window_bounds = array<i64: 8, 128>}, {transform_indices = @transform_2, window_bounds = array<i64: 1, 8, 128>}, {transform_indices = @transform_3, window_bounds = array<i64: 1, 8, 128>}, {transform_indices = @transform_4, window_bounds = array<i64: 1, 1, 8, 128>}]} {
    %c0 = arith.constant 0 : index
    %c0_0 = arith.constant 0 : index
    %0 = vector.load %arg2[%c0, %c0_0] : memref<8x128xf32, #tpu.memory_space<vmem>>, vector<8x128xf32>
    %c0_i32 = arith.constant 0 : i32
    %1 = arith.cmpi eq, %arg1, %c0_i32 : i32
    %2 = arith.extui %1 : i1 to i32
    %c0_i32_1 = arith.constant 0 : i32
    %3 = arith.cmpi ne, %2, %c0_i32_1 : i32
    scf.if %3 {
      %c0_9 = arith.constant 0 : index
      %c0_10 = arith.constant 0 : index
      %13 = vector.load %arg3[%c0_9, %c0_10] : memref<8x128xf32, #tpu.memory_space<vmem>>, vector<8x128xf32>
      %14 = arith.subf %13, %0 : vector<8x128xf32>
      %15 = arith.mulf %14, %14 : vector<8x128xf32>
      %16 = vector.shape_cast %15 : vector<8x128xf32> to vector<1x8x128xf32>
      %cst_11 = arith.constant dense<0.000000e+00> : vector<8x128xf32>
      %17 = vector.multi_reduction <add>, %16, %cst_11 [0] : vector<1x8x128xf32> to vector<8x128xf32>
      %c0_12 = arith.constant 0 : index
      %c0_13 = arith.constant 0 : index
      %c0_14 = arith.constant 0 : index
      %18 = vector.load %arg5[%c0_12, %c0_13, %c0_14] : memref<1x8x128xf32, #tpu.memory_space<vmem>>, vector<1x8x128xf32>
      %19 = vector.shape_cast %18 : vector<1x8x128xf32> to vector<8x128xf32>
      %20 = vector.shape_cast %17 : vector<8x128xf32> to vector<1x8x128xf32>
      tpu.vector_store %arg5[%c0_12, %c0_13, %c0_14], %20 {strides = array<i32>} : memref<1x8x128xf32, #tpu.memory_space<vmem>>, vector<1x8x128xf32>,
    } else {
    }
    %c0_2 = arith.constant 0 : index
    %c0_3 = arith.constant 0 : index
    %c0_4 = arith.constant 0 : index
    %4 = vector.load %arg4[%c0_2, %c0_3, %c0_4] : memref<1x8x128xf32, #tpu.memory_space<vmem>>, vector<1x8x128xf32>
    %5 = vector.shape_cast %4 : vector<1x8x128xf32> to vector<8x128xf32>
    %6 = arith.subf %5, %0 : vector<8x128xf32>
    %7 = arith.mulf %6, %6 : vector<8x128xf32>
    %8 = vector.shape_cast %7 : vector<8x128xf32> to vector<1x8x128xf32>
    %cst = arith.constant dense<0.000000e+00> : vector<8x128xf32>
    %9 = vector.multi_reduction <add>, %8, %cst [0] : vector<1x8x128xf32> to vector<8x128xf32>
    %c0_5 = arith.constant 0 : index
    %c0_6 = arith.constant 0 : index
    %c0_7 = arith.constant 0 : index
    %c0_8 = arith.constant 0 : index
    %10 = vector.load %arg6[%c0_5, %c0_6, %c0_7, %c0_8] : memref<1x1x8x128xf32, #tpu.memory_space<vmem>>, vector<1x1x8x128xf32>
    %11 = vector.shape_cast %10 : vector<1x1x8x128xf32> to vector<8x128xf32>
    %12 = vector.shape_cast %9 : vector<8x128xf32> to vector<1x1x8x128xf32>
    tpu.vector_store %arg6[%c0_5, %c0_6, %c0_7, %c0_8], %12 {strides = array<i32>} : memref<1x1x8x128xf32, #tpu.memory_space<vmem>>, vector<1x1x8x128xf32>,
    return
  }
  func.func @transform_0(%arg0: i32, %arg1: i32) -> (i32, i32) {
    %c0_i32 = arith.constant 0 : i32
    %c0_i32_0 = arith.constant 0 : i32
    return %arg0, %c0_i32 : i32, i32
  }
  func.func @transform_1(%arg0: i32, %arg1: i32) -> (i32, i32) {
    %c0_i32 = arith.constant 0 : i32
    %c0_i32_0 = arith.constant 0 : i32
    return %arg0, %c0_i32 : i32, i32
  }
  func.func @transform_2(%arg0: i32, %arg1: i32) -> (i32, i32, i32) {
    %c0_i32 = arith.constant 0 : i32
    %c0_i32_0 = arith.constant 0 : i32
    return %arg1, %arg0, %c0_i32 : i32, i32, i32
  }
  func.func @transform_3(%arg0: i32, %arg1: i32) -> (i32, i32, i32) {
    %c0_i32 = arith.constant 0 : i32
    %c0_i32_0 = arith.constant 0 : i32
    %c0_i32_1 = arith.constant 0 : i32
    return %arg0, %c0_i32, %c0_i32_0 : i32, i32, i32
  }
  func.func @transform_4(%arg0: i32, %arg1: i32) -> (i32, i32, i32, i32) {
    %c0_i32 = arith.constant 0 : i32
    %c0_i32_0 = arith.constant 0 : i32
    %c0_i32_1 = arith.constant 0 : i32
    return %arg0, %arg1, %c0_i32, %c0_i32_0 : i32, i32, i32, i32
  }
}

</mosaic_0001>

<llo_original>
// kernel: drcn_loss.1
$region0: #{drcn_loss.1}
  #allocation0 [shape = 'u32[]', space=smem, size = 0x4, offset = 0x4, fixed_abs, tag = 'smem constant byte address 0x4 - core index']
  #allocation1 [shape = 'u32[144,128]{1,0:T(1,128)}', space=vmem, size = 0x12000, scoped, tag = 'internal scratch']
  %s0 = inlined_call_operand.vmem [shape: f32[16,128], index: 0, kind: input, shape index: {}]
  %s1 = inlined_call_operand.vmem [shape: f32[16,128], index: 1, kind: input, shape index: {}]
  %s2 = inlined_call_operand.vmem [shape: f32[4,16,128], index: 2, kind: input, shape index: {}]
  %s3 = inlined_call_operand.vmem [shape: f32[2,8,128], index: 3, kind: output, shape index: {0}]
  %s4 = inlined_call_operand.vmem [shape: f32[2,4,8,128], index: 4, kind: output, shape index: {1}]
  %5 = xla_tuple %s3, %s4
  %s6 = sld [smem:[#allocation0]]
  $region57: #{drcn_loss.1} parent=0
    _
  %s8 = ssub.s32 1, %s6
  %s9 = scalar_select 0, %s8, %s6
  loop: start=0, step=1, limit=10
  $region2: #{drcn_loss.1} parent=0 // loop_pre_header
    _
  $region3: #{drcn_loss.1} parent=0 // loop_header
    %s11 = sphi 0, %s15
    %p12 = scmp.ge.s32.totalorder %s11, 10
    %s18 = sphi 0, %s30
    %s19 = sphi 0, %s26
    %s20 = sphi 0, %s18
    %s21 = sphi 0, %s19
    %s22 = sphi 0, %s20
    %s23 = sphi 0, %s21
    %s33 = sphi 0, %s35
    %s36 = sphi 0, %s33
    %s37 = sphi 0, %s36
    %s53 = sphi 0, %s37
    %s59 = sphi 0, %s61
    %s62 = sphi 0, %s59
    %s63 = sphi 0, %s62
    %s79 = sphi 0, %s63
    %s87 = sphi 0, %s89
    %s90 = sphi 0, %s87
    %s91 = sphi 0, %s90
    %s107 = sphi 0, %s91
    %s113 = sphi 0, %s115
    %s116 = sphi 0, %s113
    %s117 = sphi 0, %s116
    %s133 = sphi 0, %s117
    %s141 = sphi 0, %s143
    %s144 = sphi 0, %s141
    %s145 = sphi 0, %s144
    %s161 = sphi 0, %s145
  $region4: #{drcn_loss.1} parent=0 // loop_header_branch
    %14 = sbr.rel (%p12) target = $region8
  $region5: #{drcn_loss.1} parent=0 // loop_body
    %s16 = ssub.s32 %s11, 1
    %s17 = ssub.s32 %s11, 2
    %s24 = sadd.s32 1, %s19
    %p25 = scmp.ge.s32.totalorder %s24, 4
    %s26 = scalar_select %p25, 0, %s24
    %s27 = sadd.s32 1, %s18
    %s28 = scalar_select %p25, %s27, %s18
    %p29 = scmp.ge.s32.totalorder %s28, 2
    %s30 = scalar_select %p29, 0, %s28
    %s31 = ssub.s32 %s18, %s30
    %p32 = scmp.eq.s32.totalorder %s31, 0
    %s34 = sadd.s32 %s33, 1
    %s35 = scalar_select %p32, %s33, %s34
    %p38 = pneg %p32
    %p39 = scmp.eq.s32.totalorder %s11, 7
    %p40 = por %p38, %p39
    %p41 = scmp.ne.s32.totalorder %s33, %s36
    %p42 = scmp.eq.s32.totalorder %s11, 0
    %p43 = por %p41, %p42
    %p44 = scmp.ne.s32.totalorder %s33, %s36
    %p45 = scmp.eq.s32.totalorder %s16, 7
    %p46 = por %p44, %p45
    %p47 = scmp.ne.s32.totalorder %s36, %s37
    %p48 = scmp.eq.s32.totalorder %s16, 0
    %p49 = por %p47, %p48
    %p50 = scmp.ne.s32.totalorder %s36, %s37
    %p51 = scmp.eq.s32.totalorder %s17, 7
    %p52 = por %p50, %p51
    %p54 = scmp.ne.s32.totalorder %s37, %s53
    %p55 = scmp.eq.s32.totalorder %s17, 0
    %p56 = por %p54, %p55
    %s57 = ssub.s32 %s18, %s30
    %p58 = scmp.eq.s32.totalorder %s57, 0
    %s60 = sadd.s32 %s59, 1
    %s61 = scalar_select %p58, %s59, %s60
    %p64 = pneg %p58
    %p65 = scmp.eq.s32.totalorder %s11, 7
    %p66 = por %p64, %p65
    %p67 = scmp.ne.s32.totalorder %s59, %s62
    %p68 = scmp.eq.s32.totalorder %s11, 0
    %p69 = por %p67, %p68
    %p70 = scmp.ne.s32.totalorder %s59, %s62
    %p71 = scmp.eq.s32.totalorder %s16, 7
    %p72 = por %p70, %p71
    %p73 = scmp.ne.s32.totalorder %s62, %s63
    %p74 = scmp.eq.s32.totalorder %s16, 0
    %p75 = por %p73, %p74
    %p76 = scmp.ne.s32.totalorder %s62, %s63
    %p77 = scmp.eq.s32.totalorder %s17, 7
    %p78 = por %p76, %p77
    %p80 = scmp.ne.s32.totalorder %s63, %s79
    %p81 = scmp.eq.s32.totalorder %s17, 0
    %p82 = por %p80, %p81
    %s83 = ssub.s32 %s19, %s26
    %s84 = ssub.s32 %s18, %s30
    %s85 = sor.u32 %s83, %s84
    %p86 = scmp.eq.s32.totalorder %s85, 0
    %s88 = sadd.s32 %s87, 1
    %s89 = scalar_select %p86, %s87, %s88
    %p92 = pneg %p86
    %p93 = scmp.eq.s32.totalorder %s11, 7
    %p94 = por %p92, %p93
    %p95 = scmp.ne.s32.totalorder %s87, %s90
    %p96 = scmp.eq.s32.totalorder %s11, 0
    %p97 = por %p95, %p96
    %p98 = scmp.ne.s32.totalorder %s87, %s90
    %p99 = scmp.eq.s32.totalorder %s16, 7
    %p100 = por %p98, %p99
    %p101 = scmp.ne.s32.totalorder %s90, %s91
    %p102 = scmp.eq.s32.totalorder %s16, 0
    %p103 = por %p101, %p102
    %p104 = scmp.ne.s32.totalorder %s90, %s91
    %p105 = scmp.eq.s32.totalorder %s17, 7
    %p106 = por %p104, %p105
    %p108 = scmp.ne.s32.totalorder %s91, %s107
    %p109 = scmp.eq.s32.totalorder %s17, 0
    %p110 = por %p108, %p109
    %s111 = ssub.s32 %s18, %s30
    %p112 = scmp.eq.s32.totalorder %s111, 0
    %s114 = sadd.s32 %s113, 1
    %s115 = scalar_select %p112, %s113, %s114
    %p118 = pneg %p112
    %p119 = scmp.eq.s32.totalorder %s11, 7
    %p120 = por %p118, %p119
    %p121 = scmp.ne.s32.totalorder %s113, %s116
    %p122 = scmp.eq.s32.totalorder %s11, 0
    %p123 = por %p121, %p122
    %p124 = scmp.ne.s32.totalorder %s113, %s116
    %p125 = scmp.eq.s32.totalorder %s16, 7
    %p126 = por %p124, %p125
    %p127 = scmp.ne.s32.totalorder %s116, %s117
    %p128 = scmp.eq.s32.totalorder %s16, 0
    %p129 = por %p127, %p128
    %p130 = scmp.ne.s32.totalorder %s116, %s117
    %p131 = scmp.eq.s32.totalorder %s17, 7
    %p132 = por %p130, %p131
    %p134 = scmp.ne.s32.totalorder %s117, %s133
    %p135 = scmp.eq.s32.totalorder %s17, 0
    %p136 = por %p134, %p135
    %s137 = ssub.s32 %s18, %s30
    %s138 = ssub.s32 %s19, %s26
    %s139 = sor.u32 %s137, %s138
    %p140 = scmp.eq.s32.totalorder %s139, 0
    %s142 = sadd.s32 %s141, 1
    %s143 = scalar_select %p140, %s141, %s142
    %p146 = pneg %p140
    %p147 = scmp.eq.s32.totalorder %s11, 7
    %p148 = por %p146, %p147
    %p149 = scmp.ne.s32.totalorder %s141, %s144
    %p150 = scmp.eq.s32.totalorder %s11, 0
    %p151 = por %p149, %p150
    %p152 = scmp.ne.s32.totalorder %s141, %s144
    %p153 = scmp.eq.s32.totalorder %s16, 7
    %p154 = por %p152, %p153
    %p155 = scmp.ne.s32.totalorder %s144, %s145
    %p156 = scmp.eq.s32.totalorder %s16, 0
    %p157 = por %p155, %p156
    %p158 = scmp.ne.s32.totalorder %s144, %s145
    %p159 = scmp.eq.s32.totalorder %s17, 7
    %p160 = por %p158, %p159
    %p162 = scmp.ne.s32.totalorder %s145, %s161
    %p163 = scmp.eq.s32.totalorder %s17, 0
    %p164 = por %p162, %p163
    %p165 = scmp.le.s32.totalorder 1, %s11
    %p166 = scmp.lt.s32.totalorder %s11, 9
    %p167 = pnand %p165, %p166
    %p168 = pneg %p167
    // Predicated region
    $region9: #{drcn_loss.1} parent=5 // pred_check
      _
    $region10: #{drcn_loss.1} parent=5 // pred_check_branch
      %170 = sbr.rel (%p167) target = $region12
    $region11: #{drcn_loss.1} parent=5 // pred_region
      %s171 = ssub.s32 %s11, 1
    $region12: #{drcn_loss.1} parent=5 // pred_fallthru
      _
    %p172 = scmp.lt.s32.totalorder %s11, 8
    // Predicated region
    $region13: #{drcn_loss.1} parent=5 // pred_check
      %p173 = pneg %p172
    $region14: #{drcn_loss.1} parent=5 // pred_check_branch
      %175 = sbr.rel (%p173) target = $region16
    $region15: #{drcn_loss.1} parent=5 // pred_region
      // Predicated region
      $region17: #{drcn_loss.1} parent=15 // pred_check
        %p176 = pneg %p43
      $region18: #{drcn_loss.1} parent=15 // pred_check_branch
        %178 = sbr.rel (%p176) target = $region20
      $region19: #{drcn_loss.1} parent=15 // pred_region
        %p179 = scmp.lt.s32.totalorder %s18, 1
        %s180 = scalar_select %p179, %s18, 1
        %s181 = smul.addr %s180, 8
        %s182 = scalar_lea.vmem %s0, %s181
      $region20: #{drcn_loss.1} parent=15 // pred_fallthru
        _
      // Predicated region
      $region21: #{drcn_loss.1} parent=15 // pred_check
        %p183 = pneg %p69
      $region22: #{drcn_loss.1} parent=15 // pred_check_branch
        %185 = sbr.rel (%p183) target = $region24
      $region23: #{drcn_loss.1} parent=15 // pred_region
        %p186 = scmp.lt.s32.totalorder %s18, 1
        %s187 = scalar_select %p186, %s18, 1
        %s188 = smul.addr %s187, 8
        %s189 = scalar_lea.vmem %s1, %s188
      $region24: #{drcn_loss.1} parent=15 // pred_fallthru
        _
      // Predicated region
      $region25: #{drcn_loss.1} parent=15 // pred_check
        %p190 = pneg %p97
      $region26: #{drcn_loss.1} parent=15 // pred_check_branch
        %192 = sbr.rel (%p190) target = $region28
      $region27: #{drcn_loss.1} parent=15 // pred_region
        %p193 = scmp.lt.s32.totalorder %s19, 3
        %s194 = scalar_select %p193, %s19, 3
        %p195 = scmp.lt.s32.totalorder %s18, 1
        %s196 = scalar_select %p195, %s18, 1
        %s197 = smul.addr %s194, 2
        %s198 = sadd.s32 %s196, %s197
        %s199 = smul.addr %s198, 8
        %s200 = scalar_lea.vmem %s2, %s199
      $region28: #{drcn_loss.1} parent=15 // pred_fallthru
        _
    $region16: #{drcn_loss.1} parent=5 // pred_fallthru
      _
    %p201 = scmp.le.s32.totalorder 1, %s11
    %p202 = scmp.lt.s32.totalorder %s11, 9
    %p203 = pnand %p201, %p202
    %p204 = pneg %p203
    // Predicated region
    $region29: #{drcn_loss.1} parent=5 // pred_check
      _
    $region30: #{drcn_loss.1} parent=5 // pred_check_branch
      %206 = sbr.rel (%p203) target = $region32
    $region31: #{drcn_loss.1} parent=5 // pred_region
      %s207 = ssub.s32 %s11, 1
      %p208 = scmp.lt.s32.totalorder %s20, 1
      %s209 = scalar_select %p208, %s20, 1
      %s210 = smul.addr %s209, 8
      %s211 = scalar_lea.vmem %s0, %s210
      %p212 = pneg %p49
      %p213 = pneg %p46
      %p214 = scmp.lt.s32.totalorder %s20, 1
      %s215 = scalar_select %p214, %s20, 1
      %s216 = smul.addr %s215, 8
      %s217 = scalar_lea.vmem %s1, %s216
      %p218 = pneg %p75
      %p219 = pneg %p72
      %p220 = scmp.lt.s32.totalorder %s21, 3
      %s221 = scalar_select %p220, %s21, 3
      %p222 = scmp.lt.s32.totalorder %s20, 1
      %s223 = scalar_select %p222, %s20, 1
      %s224 = smul.addr %s221, 2
      %s225 = sadd.s32 %s223, %s224
      %s226 = smul.addr %s225, 8
      %s227 = scalar_lea.vmem %s2, %s226
      %p228 = pneg %p103
      %p229 = pneg %p100
      %p230 = pneg %p129
      %p231 = pneg %p126
      %p232 = scmp.lt.s32.totalorder %s20, 1
      %s233 = scalar_select %p232, %s20, 1
      %s234 = smul.addr %s233, 8
      %s235 = scalar_lea.vmem %s3, %s234
      %p236 = pneg %p157
      %p237 = pneg %p154
      %p238 = scmp.lt.s32.totalorder %s20, 1
      %s239 = scalar_select %p238, %s20, 1
      %p240 = scmp.lt.s32.totalorder %s21, 3
      %s241 = scalar_select %p240, %s21, 3
      %s242 = smul.addr %s239, 4
      %s243 = sadd.s32 %s241, %s242
      %s244 = smul.addr %s243, 8
      %s245 = scalar_lea.vmem %s4, %s244
      %p246 = scmp.lt.s32.totalorder %s20, 1
      %s247 = scalar_select %p246, %s20, 1
      %s248 = smul.addr %s247, 8
      %s249 = scalar_lea.vmem %s0, %s248
      %p250 = scmp.lt.s32.totalorder %s20, 1
      %s251 = scalar_select %p250, %s20, 1
      %s252 = smul.addr %s251, 8
      %s253 = scalar_lea.vmem %s1, %s252
      %p254 = scmp.lt.s32.totalorder %s21, 3
      %s255 = scalar_select %p254, %s21, 3
      %p256 = scmp.lt.s32.totalorder %s20, 1
      %s257 = scalar_select %p256, %s20, 1
      %s258 = smul.addr %s255, 2
      %s259 = sadd.s32 %s257, %s258
      %s260 = smul.addr %s259, 8
      %s261 = scalar_lea.vmem %s2, %s260
      %p262 = scmp.lt.s32.totalorder %s20, 1
      %s263 = scalar_select %p262, %s20, 1
      %s264 = smul.addr %s263, 8
      %s265 = scalar_lea.vmem %s3, %s264
      %p266 = scmp.lt.s32.totalorder %s20, 1
      %s267 = scalar_select %p266, %s20, 1
      %p268 = scmp.lt.s32.totalorder %s21, 3
      %s269 = scalar_select %p268, %s21, 3
      %s270 = smul.addr %s267, 4
      %s271 = sadd.s32 %s269, %s270
      %s272 = smul.addr %s271, 8
      %s273 = scalar_lea.vmem %s4, %s272
      %v274 = vld [vmem:[%s249] sm:$0xff]
      %p275 = scmp.eq.s32.totalorder %s21, 0
      // Predicated region
      $region33: #{drcn_loss.1} parent=31 // pred_check
        %p276 = pneg %p275
      $region34: #{drcn_loss.1} parent=31 // pred_check_branch
        %278 = sbr.rel (%p276) target = $region36
      $region35: #{drcn_loss.1} parent=31 // pred_region
        %v279 = vld [vmem:[%s253] sm:$0xff]
        %v280 = vsub.f32 %v279, %v274
        %v281 = vmul.f32 %v280, %v280
        %v282 = vadd.f32 %v281, 0.0
        %283 = vst [vmem:[%s265] sm:$0xff] %v282
      $region36: #{drcn_loss.1} parent=31 // pred_fallthru
        _
      %v284 = vld [vmem:[%s261] sm:$0xff]
      %v285 = vsub.f32 %v284, %v274
      %v286 = vmul.f32 %v285, %v285
      %v287 = vadd.f32 %v286, 0.0
      %288 = vst [vmem:[%s273] sm:$0xff] %v287
      %p289 = scmp.lt.s32.totalorder %s20, 1
      %s290 = scalar_select %p289, %s20, 1
      %s291 = smul.addr %s290, 8
      %s292 = scalar_lea.vmem %s3, %s291
      %p293 = scmp.lt.s32.totalorder %s20, 1
      %s294 = scalar_select %p293, %s20, 1
      %p295 = scmp.lt.s32.totalorder %s21, 3
      %s296 = scalar_select %p295, %s21, 3
      %s297 = smul.addr %s294, 4
      %s298 = sadd.s32 %s296, %s297
      %s299 = smul.addr %s298, 8
      %s300 = scalar_lea.vmem %s4, %s299
      // Predicated region
      $region37: #{drcn_loss.1} parent=31 // pred_check
        %p301 = pneg %p126
      $region38: #{drcn_loss.1} parent=31 // pred_check_branch
        %303 = sbr.rel (%p301) target = $region40
      $region39: #{drcn_loss.1} parent=31 // pred_region
        _
      $region40: #{drcn_loss.1} parent=31 // pred_fallthru
        _
      // Predicated region
      $region41: #{drcn_loss.1} parent=31 // pred_check
        %p304 = pneg %p154
      $region42: #{drcn_loss.1} parent=31 // pred_check_branch
        %306 = sbr.rel (%p304) target = $region44
      $region43: #{drcn_loss.1} parent=31 // pred_region
        _
      $region44: #{drcn_loss.1} parent=31 // pred_fallthru
        _
    $region32: #{drcn_loss.1} parent=5 // pred_fallthru
      _
    %p307 = scmp.le.s32.totalorder 2, %s11
    // Predicated region
    $region45: #{drcn_loss.1} parent=5 // pred_check
      %p308 = pneg %p307
    $region46: #{drcn_loss.1} parent=5 // pred_check_branch
      %310 = sbr.rel (%p308) target = $region48
    $region47: #{drcn_loss.1} parent=5 // pred_region
      %s311 = ssub.s32 %s11, 2
      // Predicated region
      $region49: #{drcn_loss.1} parent=47 // pred_check
        %p312 = pneg %p132
      $region50: #{drcn_loss.1} parent=47 // pred_check_branch
        %314 = sbr.rel (%p312) target = $region52
      $region51: #{drcn_loss.1} parent=47 // pred_region
        %p315 = scmp.lt.s32.totalorder %s22, 1
        %s316 = scalar_select %p315, %s22, 1
        %s317 = smul.addr %s316, 8
        %s318 = scalar_lea.vmem %s3, %s317
      $region52: #{drcn_loss.1} parent=47 // pred_fallthru
        _
      // Predicated region
      $region53: #{drcn_loss.1} parent=47 // pred_check
        %p319 = pneg %p160
      $region54: #{drcn_loss.1} parent=47 // pred_check_branch
        %321 = sbr.rel (%p319) target = $region56
      $region55: #{drcn_loss.1} parent=47 // pred_region
        %p322 = scmp.lt.s32.totalorder %s22, 1
        %s323 = scalar_select %p322, %s22, 1
        %p324 = scmp.lt.s32.totalorder %s23, 3
        %s325 = scalar_select %p324, %s23, 3
        %s326 = smul.addr %s323, 4
        %s327 = sadd.s32 %s325, %s326
        %s328 = smul.addr %s327, 8
        %s329 = scalar_lea.vmem %s4, %s328
      $region56: #{drcn_loss.1} parent=47 // pred_fallthru
        _
    $region48: #{drcn_loss.1} parent=5 // pred_fallthru
      _
  $region6: #{drcn_loss.1} parent=0 // loop_footer
    %s15 = sadd.s32 1, %s11
  $region7: #{drcn_loss.1} parent=0 // loop_footer_branch
    %10 = sbr.rel target = $region3
  $region8: #{drcn_loss.1} parent=0 // loop_exit
    _

</llo_original>
